<compile_context>
chip_gen: v7x
topology: tpu7x:2x2x1
jax: 0.10.0
libtpu: 0.0.40
codegen_flags: <defaults>
</compile_context>

<pallas_src>
import functools

import jax
import jax.numpy as jnp
from jax.experimental import pallas as pl
from jax.experimental.pallas import tpu as pltpu

LANE = 128


def kg_path_walker_kernel(
    x_ref,       # [B, 2D]      streamed per step
    hc0_ref,     # [2, B, 128]  initial h / c (lane-padded), resident
    rel_ref,     # [128, 128]   relations zero-padded, resident
    wh_ref,      # [128, 512]   h -> [HC | ALPHA | I(rep) | O(rep)], resident
    wx1_ref,     # [2D, 128]    x -> ALPHA block, resident
    wz_ref,      # [128, 256]   z -> [ZC | ZO(rep)], resident
    vecs_ref,    # [4, 512]     row0=b1, row1=bz, row2=wco, row3=wci, resident
    out_ref,     # [B, 384]     per-step slab: [h | c | r]
    h_s, c_s,    # VMEM scratch [B, 128] each: carried state (zeros in lanes D:)
):
    f32 = jnp.float32
    L = LANE
    t = pl.program_id(0)

    # Initialize carried state once.
    @pl.when(t == 0)
    def _():
        h_s[...] = hc0_ref[0]
        c_s[...] = hc0_ref[1]

    x = x_ref[...]            # [B, 2D]
    h = h_s[...]              # [B, 128] (lanes D: are exactly 0)
    c = c_s[...]              # [B, 128]

    # ---- fused h-projection: one MXU push yields HC, ALPHA, I, O blocks ----
    b1 = vecs_ref[0:1, :]                                              # [1, 512]
    ph = jnp.dot(h, wh_ref[...], preferred_element_type=f32) + b1      # [B, 512]
    px = jnp.dot(x, wx1_ref[...], preferred_element_type=f32)          # [B, 128]

    hc_pre = ph[:, 0:L]                        # W_hc(h) + b_hc        (lanes D: = 0)
    alpha = jax.nn.sigmoid(ph[:, L:2 * L] + px)  # full 128-lane block (pad lanes -> 0.5)
    i_pre = ph[:, 2 * L:3 * L]                 # W_hi(h)+b_hi+b_ci, replicated lanes
    ho_rep = ph[:, 3 * L:4 * L]                # W_ho(h)+b_ho+b_co, replicated lanes

    # ---- r_t: padded relations nullify the 0.5 sigmoid lanes ----
    r = jnp.dot(alpha, rel_ref[...], preferred_element_type=f32)       # [B, 128], lanes D: = 0
    z = h + r                                                          # [B, 128], lanes D: = 0

    # ---- fused z-projection ----
    bz = vecs_ref[1:2, 0:2 * L]                                        # [1, 256]
    pz = jnp.dot(z, wz_ref[...], preferred_element_type=f32) + bz      # [B, 256]
    zc_pre = pz[:, 0:L]
    zo_rep = pz[:, L:2 * L]

    # ---- i-gate: c contribution on VPU+XLU (off the critical path) ----
    wci_row = vecs_ref[3:4, 0:L]                                       # [1, 128]
    ci = jnp.sum(c * wci_row, axis=-1, keepdims=True)                  # [B, 1]
    i_g = jax.nn.sigmoid(i_pre + ci)                                   # [B, 128], all lanes equal

    c_cand = jnp.tanh(zc_pre + hc_pre)                                 # lanes D: stay 0
    c_new = (1.0 - i_g) * c + i_g * c_cand                             # lanes D: stay 0

    # ---- o-gate: W_co on VPU+XLU (avoids a 4th serialized MXU round-trip) ----
    wco_row = vecs_ref[2:3, 0:L]                                       # [1, 128]
    co = jnp.sum(c_new * wco_row, axis=-1, keepdims=True)              # [B, 1]
    o_g = jax.nn.sigmoid(zo_rep + ho_rep + co)                         # [B, 128]
    h_new = o_g * jnp.tanh(c_new)                                      # lanes D: stay 0

    # ---- carry state, emit lane-aligned output blocks ----
    h_s[...] = h_new
    c_s[...] = c_new
    out_ref[:, 0:L] = h_new
    out_ref[:, L:2 * L] = c_new
    out_ref[:, 2 * L:3 * L] = r


def fuse_params(params, dim, n_rels):
    """Compose + lane-align the per-Linear params once, at init time."""
    D, R, L = dim, n_rels, LANE
    f32 = jnp.float32

    wx, bx = params["wx"], params["bx"]          # [2D, D], [1, D]
    wxa, bxa = params["wxa"], params["bxa"]      # [D, R],  [1, R]
    wx_xa = wx @ wxa                             # exact linear composition of W_xa(W_x(x))
    bx_xa = bx @ wxa + bxa

    # h-projection: 4 lane-aligned 128-column blocks (HC | ALPHA | I | O).
    wh = jnp.zeros((L, 4 * L), f32)
    wh = wh.at[0:D, 0:D].set(params["whc"])
    wh = wh.at[0:D, L:L + R].set(params["wha"])
    wh = wh.at[0:D, 2 * L:3 * L].set(jnp.broadcast_to(params["whi"], (D, L)))
    wh = wh.at[0:D, 3 * L:4 * L].set(jnp.broadcast_to(params["who"], (D, L)))

    # x -> ALPHA block only.
    wx1 = jnp.zeros((2 * D, L), f32)
    wx1 = wx1.at[:, 0:R].set(wx_xa)

    # z-projection: (ZC | ZO replicated).
    wz = jnp.zeros((L, 2 * L), f32)
    wz = wz.at[0:D, 0:D].set(params["wzc"])
    wz = wz.at[0:D, L:2 * L].set(jnp.broadcast_to(params["wzo"], (D, L)))

    # Single row-vector slab: biases + wco / wci rows.
    vecs = jnp.zeros((4, 4 * L), f32)
    vecs = vecs.at[0, 0:D].set(params["bhc"][0])
    vecs = vecs.at[0, L:L + R].set((params["bha"] + bx_xa)[0])
    vecs = vecs.at[0, 2 * L:3 * L].set(params["bhi"][0, 0] + params["bci"][0, 0])
    vecs = vecs.at[0, 3 * L:4 * L].set(params["bho"][0, 0] + params["bco"][0, 0])
    vecs = vecs.at[1, 0:D].set(params["bzc"][0])
    vecs = vecs.at[1, L:2 * L].set(params["bzo"][0, 0])
    vecs = vecs.at[2, 0:D].set(params["wco"][:, 0])
    vecs = vecs.at[3, 0:D].set(params["wci"][:, 0])

    return {"wh": wh, "wx1": wx1, "wz": wz, "vecs": vecs}


def kg_path_walker_sequence(x_seq, relations, h0, c0, fused):
    """Run the cell over a [T, B, 2D] sequence inside ONE pallas_call."""
    T, B, twoD = x_seq.shape
    D = h0.shape[1]
    R = relations.shape[0]
    L = LANE
    OUT_W = 3 * L
    f32 = jnp.float32

    hc0 = jnp.zeros((2, B, L), f32)
    hc0 = hc0.at[0, :, 0:D].set(h0.astype(f32))
    hc0 = hc0.at[1, :, 0:D].set(c0.astype(f32))
    rel_pad = jnp.zeros((L, L), f32).at[0:R, 0:D].set(relations.astype(f32))

    wh, wx1, wz, vecs = fused["wh"], fused["wx1"], fused["wz"], fused["vecs"]

    flops = int(2 * T * B * (L * 4 * L + twoD * L + L * L + L * 2 * L))
    transcendentals = int(T * B * 5 * L)
    bytes_accessed = int(4 * (x_seq.size + hc0.size + rel_pad.size + wh.size
                              + wx1.size + wz.size + vecs.size + T * B * OUT_W))

    grid_spec = pltpu.PrefetchScalarGridSpec(
        num_scalar_prefetch=0,
        grid=(T,),
        in_specs=[
            pl.BlockSpec((None, B, twoD), lambda t: (t, 0, 0)),   # x_t (streamed)
            pl.BlockSpec((2, B, L), lambda t: (0, 0, 0)),         # hc0 (resident)
            pl.BlockSpec((L, L), lambda t: (0, 0)),               # relations (resident)
            pl.BlockSpec((L, 4 * L), lambda t: (0, 0)),           # wh (resident)
            pl.BlockSpec((twoD, L), lambda t: (0, 0)),            # wx1 (resident)
            pl.BlockSpec((L, 2 * L), lambda t: (0, 0)),           # wz (resident)
            pl.BlockSpec((4, 4 * L), lambda t: (0, 0)),           # vecs (resident)
        ],
        out_specs=pl.BlockSpec((None, B, OUT_W), lambda t: (t, 0, 0)),
        scratch_shapes=[pltpu.VMEM((B, L), f32),                  # h state
                        pltpu.VMEM((B, L), f32)],                 # c state
    )

    slab = pl.pallas_call(
        kg_path_walker_kernel,
        out_shape=jax.ShapeDtypeStruct((T, B, OUT_W), f32),
        grid_spec=grid_spec,
        compiler_params=pltpu.CompilerParams(
            dimension_semantics=("arbitrary",)),
        cost_estimate=pl.CostEstimate(
            flops=flops, transcendentals=transcendentals,
            bytes_accessed=bytes_accessed),
    )(x_seq.astype(f32), hc0, rel_pad, wh, wx1, wz, vecs)

    h_seq = slab[:, :, 0:D]
    c_seq = slab[:, :, L:L + D]
    r_seq = slab[:, :, 2 * L:2 * L + D]
    return h_seq, c_seq, r_seq


def kg_path_walker(x_bar, relations, h_t, c_t, fused):
    """Single step — exact signature of the PyTorch module's forward."""
    h_seq, c_seq, r_seq = kg_path_walker_sequence(
        x_bar[None, :, :], relations, h_t, c_t, fused)
    return h_seq[0], c_seq[0], r_seq[0]


def init_params(key, dim, n_rels):
    """Deterministic parameter init. Weights stored as [in, out]; biases [1, out]."""
    def linear(k, fan_in, fan_out):
        kw, kb = jax.random.split(k)
        bound = 1.0 / jnp.sqrt(fan_in)
        w = jax.random.uniform(kw, (fan_in, fan_out), jnp.float32, -bound, bound)
        b = jax.random.uniform(kb, (1, fan_out), jnp.float32, -bound, bound)
        return w, b

    keys = jax.random.split(key, 10)
    p = {}
    p["wx"], p["bx"] = linear(keys[0], 2 * dim, dim)
    p["whi"], p["bhi"] = linear(keys[1], dim, 1)
    p["wci"], p["bci"] = linear(keys[2], dim, 1)
    p["wzc"], p["bzc"] = linear(keys[3], dim, dim)
    p["whc"], p["bhc"] = linear(keys[4], dim, dim)
    p["wzo"], p["bzo"] = linear(keys[5], dim, 1)
    p["who"], p["bho"] = linear(keys[6], dim, 1)
    p["wco"], p["bco"] = linear(keys[7], dim, 1)
    p["wha"], p["bha"] = linear(keys[8], dim, n_rels)
    p["wxa"], p["bxa"] = linear(keys[9], dim, n_rels)
    return p


def reference_forward(x, rel, h, c, p):
    """Pure-JAX, unfused forward matching the PyTorch module op-for-op."""
    xb = x @ p["wx"] + p["bx"]
    alpha = jax.nn.sigmoid(h @ p["wha"] + p["bha"] + xb @ p["wxa"] + p["bxa"])
    r = alpha @ rel
    z = h + r
    i = jax.nn.sigmoid(h @ p["whi"] + p["bhi"] + c @ p["wci"] + p["bci"])
    c_new = (1.0 - i) * c + i * jnp.tanh(z @ p["wzc"] + p["bzc"]
                                         + h @ p["whc"] + p["bhc"])
    o = jax.nn.sigmoid(z @ p["wzo"] + p["bzo"]
                       + h @ p["who"] + p["bho"]
                       + c_new @ p["wco"] + p["bco"])
    h_new = o * jnp.tanh(c_new)
    return h_new, c_new, r


if __name__ == "__main__":
    B, DIM, N_RELS, T = 8, 32, 16, 6

    key = jax.random.PRNGKey(0)
    k_x, k_rel, k_h, k_c, k_p = jax.random.split(key, 5)

    x_seq = jax.random.normal(k_x, (T, B, 2 * DIM), jnp.float32)
    relations = jax.random.normal(k_rel, (N_RELS, DIM), jnp.float32)
    h0 = jax.random.normal(k_h, (B, DIM), jnp.float32)
    c0 = jax.random.normal(k_c, (B, DIM), jnp.float32)

    params = init_params(k_p, DIM, N_RELS)
    fused = fuse_params(params, DIM, N_RELS)

    # --- Sequence run: time loop lives inside the kernel (grid over T) ---
    h_seq, c_seq, r_seq = kg_path_walker_sequence(x_seq, relations, h0, c0, fused)
    jax.block_until_ready((h_seq, c_seq, r_seq))
    assert h_seq.shape == (T, B, DIM)
    assert c_seq.shape == (T, B, DIM)
    assert r_seq.shape == (T, B, DIM)

    # Reference: apply the unfused single-step module T times.
    h, c = h0, c0
    hs, cs, rs = [], [], []
    for t in range(T):
        h, c, r = reference_forward(x_seq[t], relations, h, c, params)
        hs.append(h); cs.append(c); rs.append(r)
    h_ref, c_ref, r_ref = jnp.stack(hs), jnp.stack(cs), jnp.stack(rs)

    assert jnp.allclose(r_seq, r_ref, atol=1e-3, rtol=1e-3)
    assert jnp.allclose(c_seq, c_ref, atol=1e-3, rtol=1e-3)
    assert jnp.allclose(h_seq, h_ref, atol=1e-3, rtol=1e-3)

    # --- Single-step call (matches the PyTorch forward signature exactly) ---
    h1, c1, r1 = kg_path_walker(x_seq[0], relations, h0, c0, fused)
    jax.block_until_ready((h1, c1, r1))
    h1r, c1r, r1r = reference_forward(x_seq[0], relations, h0, c0, params)
    assert jnp.allclose(h1, h1r, atol=1e-3, rtol=1e-3)
    assert jnp.allclose(c1, c1r, atol=1e-3, rtol=1e-3)
    assert jnp.allclose(r1, r1r, atol=1e-3, rtol=1e-3)

    print("KERNEL_OK")
</pallas_src>

<mosaic_0001>
module attributes {stable_mosaic.version = 11 : i64} {
  func.func @kg_path_walker_kernel(%arg0: i32, %arg1: memref<1x8x64xf32, #tpu.memory_space<vmem>>, %arg2: memref<2x8x128xf32, #tpu.memory_space<vmem>>, %arg3: memref<128x128xf32, #tpu.memory_space<vmem>>, %arg4: memref<128x512xf32, #tpu.memory_space<vmem>>, %arg5: memref<64x128xf32, #tpu.memory_space<vmem>>, %arg6: memref<128x256xf32, #tpu.memory_space<vmem>>, %arg7: memref<4x512xf32, #tpu.memory_space<vmem>>, %arg8: memref<1x8x384xf32, #tpu.memory_space<vmem>>, %arg9: memref<8x128xf32, #tpu.memory_space<vmem>>, %arg10: memref<8x128xf32, #tpu.memory_space<vmem>>) attributes {dimension_semantics = [#tpu.dimension_semantics<arbitrary>], iteration_bounds = array<i64: 6>, scalar_prefetch = 0 : i64, scratch_operands = 2 : i64, tpu.core_type = #tpu.core_type<tc>, window_params = [{transform_indices = @transform_0, window_bounds = array<i64: 1, 8, 64>}, {pipeline_mode = #tpu.pipeline_mode<synchronous>, transform_indices = @transform_1, window_bounds = array<i64: 2, 8, 128>}, {pipeline_mode = #tpu.pipeline_mode<synchronous>, transform_indices = @transform_2, window_bounds = array<i64: 128, 128>}, {pipeline_mode = #tpu.pipeline_mode<synchronous>, transform_indices = @transform_3, window_bounds = array<i64: 128, 512>}, {pipeline_mode = #tpu.pipeline_mode<synchronous>, transform_indices = @transform_4, window_bounds = array<i64: 64, 128>}, {pipeline_mode = #tpu.pipeline_mode<synchronous>, transform_indices = @transform_5, window_bounds = array<i64: 128, 256>}, {pipeline_mode = #tpu.pipeline_mode<synchronous>, transform_indices = @transform_6, window_bounds = array<i64: 4, 512>}, {transform_indices = @transform_7, window_bounds = array<i64: 1, 8, 384>}]} {
    %c0_i32 = arith.constant 0 : i32
    %0 = arith.cmpi eq, %arg0, %c0_i32 : i32
    %1 = arith.extui %0 : i1 to i32
    %c0_i32_0 = arith.constant 0 : i32
    %2 = arith.cmpi ne, %1, %c0_i32_0 : i32
    scf.if %2 {
      %c0_40 = arith.constant 0 : index
      %c0_41 = arith.constant 0 : index
      %c0_42 = arith.constant 0 : index
      %79 = vector.load %arg2[%c0_40, %c0_41, %c0_42] : memref<2x8x128xf32, #tpu.memory_space<vmem>>, vector<1x8x128xf32>
      %80 = vector.shape_cast %79 : vector<1x8x128xf32> to vector<8x128xf32>
      %c0_43 = arith.constant 0 : index
      %c0_44 = arith.constant 0 : index
      %81 = vector.load %arg9[%c0_43, %c0_44] : memref<8x128xf32, #tpu.memory_space<vmem>>, vector<8x128xf32>
      tpu.vector_store %arg9[%c0_43, %c0_44], %80 {strides = array<i32>} : memref<8x128xf32, #tpu.memory_space<vmem>>, vector<8x128xf32>,
      %c1_45 = arith.constant 1 : index
      %c0_46 = arith.constant 0 : index
      %c0_47 = arith.constant 0 : index
      %82 = vector.load %arg2[%c1_45, %c0_46, %c0_47] : memref<2x8x128xf32, #tpu.memory_space<vmem>>, vector<1x8x128xf32>
      %83 = vector.shape_cast %82 : vector<1x8x128xf32> to vector<8x128xf32>
      %c0_48 = arith.constant 0 : index
      %c0_49 = arith.constant 0 : index
      %84 = vector.load %arg10[%c0_48, %c0_49] : memref<8x128xf32, #tpu.memory_space<vmem>>, vector<8x128xf32>
      tpu.vector_store %arg10[%c0_48, %c0_49], %83 {strides = array<i32>} : memref<8x128xf32, #tpu.memory_space<vmem>>, vector<8x128xf32>,
    } else {
    }
    %c0 = arith.constant 0 : index
    %c0_1 = arith.constant 0 : index
    %c0_2 = arith.constant 0 : index
    %3 = vector.load %arg1[%c0, %c0_1, %c0_2] : memref<1x8x64xf32, #tpu.memory_space<vmem>>, vector<1x8x64xf32>
    %4 = vector.shape_cast %3 : vector<1x8x64xf32> to vector<8x64xf32>
    %c0_3 = arith.constant 0 : index
    %c0_4 = arith.constant 0 : index
    %5 = vector.load %arg9[%c0_3, %c0_4] : memref<8x128xf32, #tpu.memory_space<vmem>>, vector<8x128xf32>
    %c0_5 = arith.constant 0 : index
    %c0_6 = arith.constant 0 : index
    %6 = vector.load %arg10[%c0_5, %c0_6] : memref<8x128xf32, #tpu.memory_space<vmem>>, vector<8x128xf32>
    %c0_7 = arith.constant 0 : index
    %c0_8 = arith.constant 0 : index
    %7 = vector.load %arg7[%c0_7, %c0_8] : memref<4x512xf32, #tpu.memory_space<vmem>>, vector<1x512xf32>
    %c0_9 = arith.constant 0 : index
    %c0_10 = arith.constant 0 : index
    %8 = vector.load %arg4[%c0_9, %c0_10] : memref<128x512xf32, #tpu.memory_space<vmem>>, vector<128x512xf32>
    %cst = arith.constant dense<0.000000e+00> : vector<8x512xf32>
    %9 = tpu.matmul %5, %8, %cst {dimension_numbers = #tpu.dot_dimension_numbers<[1], [0], [0], [1], [0, 0, 1, 1], [], []>} : vector<8x128xf32>, vector<128x512xf32>, vector<8x512xf32> -> vector<8x512xf32>
    %10 = vector.broadcast %7 : vector<1x512xf32> to vector<8x512xf32>
    %11 = arith.addf %9, %10 : vector<8x512xf32>
    %c0_11 = arith.constant 0 : index
    %c0_12 = arith.constant 0 : index
    %12 = vector.load %arg5[%c0_11, %c0_12] : memref<64x128xf32, #tpu.memory_space<vmem>>, vector<64x128xf32>
    %cst_13 = arith.constant dense<0.000000e+00> : vector<8x128xf32>
    %13 = tpu.matmul %4, %12, %cst_13 {dimension_numbers = #tpu.dot_dimension_numbers<[1], [0], [0], [1], [0, 0, 1, 1], [], []>} : vector<8x64xf32>, vector<64x128xf32>, vector<8x128xf32> -> vector<8x128xf32>
    %14 = vector.extract_strided_slice %11 {offsets = [0, 0], sizes = [8, 128], strides = [1, 1]} : vector<8x512xf32> to vector<8x128xf32>
    %15 = vector.extract_strided_slice %11 {offsets = [0, 128], sizes = [8, 128], strides = [1, 1]} : vector<8x512xf32> to vector<8x128xf32>
    %16 = arith.addf %15, %13 : vector<8x128xf32>
    %17 = arith.negf %16 : vector<8x128xf32>
    %18 = math.exp %17 : vector<8x128xf32>
    %cst_14 = arith.constant 1.000000e+00 : f32
    %19 = vector.broadcast %cst_14 : f32 to vector<8x128xf32>
    %20 = arith.addf %19, %18 : vector<8x128xf32>
    %21 = arith.divf %19, %20 : vector<8x128xf32>
    %22 = vector.extract_strided_slice %11 {offsets = [0, 256], sizes = [8, 128], strides = [1, 1]} : vector<8x512xf32> to vector<8x128xf32>
    %23 = vector.extract_strided_slice %11 {offsets = [0, 384], sizes = [8, 128], strides = [1, 1]} : vector<8x512xf32> to vector<8x128xf32>
    %c0_15 = arith.constant 0 : index
    %c0_16 = arith.constant 0 : index
    %24 = vector.load %arg3[%c0_15, %c0_16] : memref<128x128xf32, #tpu.memory_space<vmem>>, vector<128x128xf32>
    %cst_17 = arith.constant dense<0.000000e+00> : vector<8x128xf32>
    %25 = tpu.matmul %21, %24, %cst_17 {dimension_numbers = #tpu.dot_dimension_numbers<[1], [0], [0], [1], [0, 0, 1, 1], [], []>} : vector<8x128xf32>, vector<128x128xf32>, vector<8x128xf32> -> vector<8x128xf32>
    %26 = arith.addf %5, %25 : vector<8x128xf32>
    %c1 = arith.constant 1 : index
    %c0_18 = arith.constant 0 : index
    %27 = vector.load %arg7[%c1, %c0_18] : memref<4x512xf32, #tpu.memory_space<vmem>>, vector<1x256xf32>
    %c0_19 = arith.constant 0 : index
    %c0_20 = arith.constant 0 : index
    %28 = vector.load %arg6[%c0_19, %c0_20] : memref<128x256xf32, #tpu.memory_space<vmem>>, vector<128x256xf32>
    %cst_21 = arith.constant dense<0.000000e+00> : vector<8x256xf32>
    %29 = tpu.matmul %26, %28, %cst_21 {dimension_numbers = #tpu.dot_dimension_numbers<[1], [0], [0], [1], [0, 0, 1, 1], [], []>} : vector<8x128xf32>, vector<128x256xf32>, vector<8x256xf32> -> vector<8x256xf32>
    %30 = vector.broadcast %27 : vector<1x256xf32> to vector<8x256xf32>
    %31 = arith.addf %29, %30 : vector<8x256xf32>
    %32 = vector.extract_strided_slice %31 {offsets = [0, 0], sizes = [8, 128], strides = [1, 1]} : vector<8x256xf32> to vector<8x128xf32>
    %33 = vector.extract_strided_slice %31 {offsets = [0, 128], sizes = [8, 128], strides = [1, 1]} : vector<8x256xf32> to vector<8x128xf32>
    %c3 = arith.constant 3 : index
    %c0_22 = arith.constant 0 : index
    %34 = vector.load %arg7[%c3, %c0_22] : memref<4x512xf32, #tpu.memory_space<vmem>>, vector<1x128xf32>
    %35 = vector.broadcast %34 : vector<1x128xf32> to vector<8x128xf32>
    %36 = arith.mulf %6, %35 : vector<8x128xf32>
    %cst_23 = arith.constant dense<0.000000e+00> : vector<8xf32>
    %37 = vector.multi_reduction <add>, %36, %cst_23 [1] : vector<8x128xf32> to vector<8xf32>
    %38 = vector.shape_cast %37 : vector<8xf32> to vector<8x1xf32>
    %39 = vector.broadcast %38 : vector<8x1xf32> to vector<8x128xf32>
    %40 = arith.addf %22, %39 : vector<8x128xf32>
    %41 = arith.negf %40 : vector<8x128xf32>
    %42 = math.exp %41 : vector<8x128xf32>
    %cst_24 = arith.constant 1.000000e+00 : f32
    %43 = vector.broadcast %cst_24 : f32 to vector<8x128xf32>
    %44 = arith.addf %43, %42 : vector<8x128xf32>
    %45 = arith.divf %43, %44 : vector<8x128xf32>
    %46 = arith.addf %32, %14 : vector<8x128xf32>
    %47 = math.tanh %46 : vector<8x128xf32>
    %cst_25 = arith.constant 1.000000e+00 : f32
    %48 = vector.broadcast %cst_25 : f32 to vector<8x128xf32>
    %49 = arith.subf %48, %45 : vector<8x128xf32>
    %50 = arith.mulf %49, %6 : vector<8x128xf32>
    %51 = arith.mulf %45, %47 : vector<8x128xf32>
    %52 = arith.addf %50, %51 : vector<8x128xf32>
    %c2 = arith.constant 2 : index
    %c0_26 = arith.constant 0 : index
    %53 = vector.load %arg7[%c2, %c0_26] : memref<4x512xf32, #tpu.memory_space<vmem>>, vector<1x128xf32>
    %54 = vector.broadcast %53 : vector<1x128xf32> to vector<8x128xf32>
    %55 = arith.mulf %52, %54 : vector<8x128xf32>
    %cst_27 = arith.constant dense<0.000000e+00> : vector<8xf32>
    %56 = vector.multi_reduction <add>, %55, %cst_27 [1] : vector<8x128xf32> to vector<8xf32>
    %57 = vector.shape_cast %56 : vector<8xf32> to vector<8x1xf32>
    %58 = arith.addf %33, %23 : vector<8x128xf32>
    %59 = vector.broadcast %57 : vector<8x1xf32> to vector<8x128xf32>
    %60 = arith.addf %58, %59 : vector<8x128xf32>
    %61 = arith.negf %60 : vector<8x128xf32>
    %62 = math.exp %61 : vector<8x128xf32>
    %cst_28 = arith.constant 1.000000e+00 : f32
    %63 = vector.broadcast %cst_28 : f32 to vector<8x128xf32>
    %64 = arith.addf %63, %62 : vector<8x128xf32>
    %65 = arith.divf %63, %64 : vector<8x128xf32>
    %66 = math.tanh %52 : vector<8x128xf32>
    %67 = arith.mulf %65, %66 : vector<8x128xf32>
    %c0_29 = arith.constant 0 : index
    %c0_30 = arith.constant 0 : index
    %68 = vector.load %arg9[%c0_29, %c0_30] : memref<8x128xf32, #tpu.memory_space<vmem>>, vector<8x128xf32>
    tpu.vector_store %arg9[%c0_29, %c0_30], %67 {strides = array<i32>} : memref<8x128xf32, #tpu.memory_space<vmem>>, vector<8x128xf32>,
    %c0_31 = arith.constant 0 : index
    %c0_32 = arith.constant 0 : index
    %69 = vector.load %arg10[%c0_31, %c0_32] : memref<8x128xf32, #tpu.memory_space<vmem>>, vector<8x128xf32>
    tpu.vector_store %arg10[%c0_31, %c0_32], %52 {strides = array<i32>} : memref<8x128xf32, #tpu.memory_space<vmem>>, vector<8x128xf32>,
    %c0_33 = arith.constant 0 : index
    %c0_34 = arith.constant 0 : index
    %c0_35 = arith.constant 0 : index
    %70 = vector.load %arg8[%c0_33, %c0_34, %c0_35] : memref<1x8x384xf32, #tpu.memory_space<vmem>>, vector<1x8x128xf32>
    %71 = vector.shape_cast %70 : vector<1x8x128xf32> to vector<8x128xf32>
    %72 = vector.shape_cast %67 : vector<8x128xf32> to vector<1x8x128xf32>
    tpu.vector_store %arg8[%c0_33, %c0_34, %c0_35], %72 {strides = array<i32>} : memref<1x8x384xf32, #tpu.memory_space<vmem>>, vector<1x8x128xf32>,
    %c0_36 = arith.constant 0 : index
    %c0_37 = arith.constant 0 : index
    %c128 = arith.constant 128 : index
    %73 = vector.load %arg8[%c0_36, %c0_37, %c128] : memref<1x8x384xf32, #tpu.memory_space<vmem>>, vector<1x8x128xf32>
    %74 = vector.shape_cast %73 : vector<1x8x128xf32> to vector<8x128xf32>
    %75 = vector.shape_cast %52 : vector<8x128xf32> to vector<1x8x128xf32>
    tpu.vector_store %arg8[%c0_36, %c0_37, %c128], %75 {strides = array<i32>} : memref<1x8x384xf32, #tpu.memory_space<vmem>>, vector<1x8x128xf32>,
    %c0_38 = arith.constant 0 : index
    %c0_39 = arith.constant 0 : index
    %c256 = arith.constant 256 : index
    %76 = vector.load %arg8[%c0_38, %c0_39, %c256] : memref<1x8x384xf32, #tpu.memory_space<vmem>>, vector<1x8x128xf32>
    %77 = vector.shape_cast %76 : vector<1x8x128xf32> to vector<8x128xf32>
    %78 = vector.shape_cast %25 : vector<8x128xf32> to vector<1x8x128xf32>
    tpu.vector_store %arg8[%c0_38, %c0_39, %c256], %78 {strides = array<i32>} : memref<1x8x384xf32, #tpu.memory_space<vmem>>, vector<1x8x128xf32>,
    return
  }
  func.func @transform_0(%arg0: i32) -> (i32, i32, i32) {
    %c0_i32 = arith.constant 0 : i32
    %c0_i32_0 = arith.constant 0 : i32
    %c0_i32_1 = arith.constant 0 : i32
    return %arg0, %c0_i32, %c0_i32_0 : i32, i32, i32
  }
  func.func @transform_1(%arg0: i32) -> (i32, i32, i32) {
    %c0_i32 = arith.constant 0 : i32
    %c0_i32_0 = arith.constant 0 : i32
    %c0_i32_1 = arith.constant 0 : i32
    %c0_i32_2 = arith.constant 0 : i32
    return %c0_i32, %c0_i32_0, %c0_i32_1 : i32, i32, i32
  }
  func.func @transform_2(%arg0: i32) -> (i32, i32) {
    %c0_i32 = arith.constant 0 : i32
    %c0_i32_0 = arith.constant 0 : i32
    %c0_i32_1 = arith.constant 0 : i32
    return %c0_i32, %c0_i32_0 : i32, i32
  }
  func.func @transform_3(%arg0: i32) -> (i32, i32) {
    %c0_i32 = arith.constant 0 : i32
    %c0_i32_0 = arith.constant 0 : i32
    %c0_i32_1 = arith.constant 0 : i32
    return %c0_i32, %c0_i32_0 : i32, i32
  }
  func.func @transform_4(%arg0: i32) -> (i32, i32) {
    %c0_i32 = arith.constant 0 : i32
    %c0_i32_0 = arith.constant 0 : i32
    %c0_i32_1 = arith.constant 0 : i32
    return %c0_i32, %c0_i32_0 : i32, i32
  }
  func.func @transform_5(%arg0: i32) -> (i32, i32) {
    %c0_i32 = arith.constant 0 : i32
    %c0_i32_0 = arith.constant 0 : i32
    %c0_i32_1 = arith.constant 0 : i32
    return %c0_i32, %c0_i32_0 : i32, i32
  }
  func.func @transform_6(%arg0: i32) -> (i32, i32) {
    %c0_i32 = arith.constant 0 : i32
    %c0_i32_0 = arith.constant 0 : i32
    %c0_i32_1 = arith.constant 0 : i32
    return %c0_i32, %c0_i32_0 : i32, i32
  }
  func.func @transform_7(%arg0: i32) -> (i32, i32, i32) {
    %c0_i32 = arith.constant 0 : i32
    %c0_i32_0 = arith.constant 0 : i32
    %c0_i32_1 = arith.constant 0 : i32
    return %arg0, %c0_i32, %c0_i32_0 : i32, i32, i32
  }
}

</mosaic_0001>

<llo_original>
// kernel: tpu_custom_call.1
$region0: #{tpu_custom_call.1}
  #allocation0 [shape = 'u32[]', space=smem, size = 0x4, offset = 0x4, fixed_abs, tag = 'smem constant byte address 0x4 - core index']
  #allocation1 [shape = 'u32[144,128]{1,0:T(1,128)}', space=vmem, size = 0x12000, scoped, tag = 'internal scratch']
  #allocation2 [shape = 'f32[8,128]{1,0:T(8,128)}', space=vmem, size = 0x1000, scoped, tag = 'scratch operand']
  #allocation3 [shape = 'f32[8,128]{1,0:T(8,128)}', space=vmem, size = 0x1000, scoped, tag = 'scratch operand']
  %s0 = inlined_call_operand.hbm [shape: f32[6,8,64], index: 0, kind: input, shape index: {}]
  %s1 = inlined_call_operand.hbm [shape: f32[2,8,128], index: 1, kind: input, shape index: {}]
  %s2 = inlined_call_operand.hbm [shape: f32[128,128], index: 2, kind: input, shape index: {}]
  %s3 = inlined_call_operand.hbm [shape: f32[128,512], index: 3, kind: input, shape index: {}]
  %s4 = inlined_call_operand.hbm [shape: f32[64,128], index: 4, kind: input, shape index: {}]
  %s5 = inlined_call_operand.hbm [shape: f32[128,256], index: 5, kind: input, shape index: {}]
  %s6 = inlined_call_operand.vmem [shape: f32[4,512], index: 6, kind: input, shape index: {}]
  %s7 = inlined_call_operand.hbm [shape: f32[6,8,384], index: 7, kind: output, shape index: {}]
  %s8 = sld [smem:[#allocation0]]
  $region89: #{tpu_custom_call.1} parent=0
    _
  %s10 = ssub.s32 1, %s8
  %s11 = scalar_select 0, %s10, %s8
  $region1: #{tpu_custom_call.1} parent=0
    #allocation4 [shape = 'u8[8192]{0}', space=vmem, size = 0x2000, scoped, tag = 'input window, operand 0']
    #allocation5 [shape = 's32[2]{0}', space=sflag, size = 0x8, scoped, tag = 'scoped memory for tpu_custom_call.1']
    #allocation6 [shape = 's32[2]{0}', space=sflag, size = 0x8, scoped, tag = 'scoped memory for tpu_custom_call.1']
    #allocation7 [shape = 'u8[8192]{0}', space=vmem, size = 0x2000, scoped, tag = 'input window, operand 1, single buffered']
    #allocation8 [shape = 's32[1]{0}', space=sflag, size = 0x4, scoped, tag = 'scoped memory for tpu_custom_call.1']
    #allocation9 [shape = 'u8[65536]{0}', space=vmem, size = 0x10000, scoped, tag = 'input window, operand 2, single buffered']
    #allocation10 [shape = 'u8[262144]{0}', space=vmem, size = 0x40000, scoped, tag = 'input window, operand 3, single buffered']
    #allocation11 [shape = 's32[1]{0}', space=sflag, size = 0x4, scoped, tag = 'scoped memory for tpu_custom_call.1']
    #allocation12 [shape = 'u8[32768]{0}', space=vmem, size = 0x8000, scoped, tag = 'input window, operand 4, single buffered']
    #allocation13 [shape = 'u8[131072]{0}', space=vmem, size = 0x20000, scoped, tag = 'input window, operand 5, single buffered']
    #allocation14 [shape = 's32[1]{0}', space=sflag, size = 0x4, scoped, tag = 'scoped memory for tpu_custom_call.1']
    #allocation15 [shape = 'u8[24576]{0}', space=vmem, size = 0x6000, scoped, tag = 'output window, operand 0']
    %12 = vsyncpa [#allocation5], 0
    %s13 = scalar_lea.sflag [#allocation5], 1
    %14 = vsyncpa %s13, 0
    %15 = vsyncpa [#allocation8], 0
    %16 = vsyncpa [#allocation11], 0
    %17 = vsyncpa [#allocation14], 0
    %18 = vsyncpa [#allocation6], 0
    %s19 = scalar_lea.sflag [#allocation6], 1
    %20 = vsyncpa %s19, 0
    loop: start=0, step=1, limit=8
    $region2: #{tpu_custom_call.1} parent=1 // loop_pre_header
      _
    $region3: #{tpu_custom_call.1} parent=1 // loop_header
      %s22 = sphi 0, %s26
      %p23 = scmp.ge.s32.totalorder %s22, 8
      %s32 = sphi 0, %s34
      %s35 = sphi 0, %s32
      %s36 = sphi 0, %s35
      %s52 = sphi 0, %s36
      %s56 = sphi 0, %s56
      %s58 = sphi 0, %s56
      %s59 = sphi 0, %s58
      %s73 = sphi 0, %s59
      %s77 = sphi 0, %s77
      %s79 = sphi 0, %s77
      %s80 = sphi 0, %s79
      %s94 = sphi 0, %s80
      %s98 = sphi 0, %s98
      %s100 = sphi 0, %s98
      %s101 = sphi 0, %s100
      %s115 = sphi 0, %s101
      %s119 = sphi 0, %s119
      %s121 = sphi 0, %s119
      %s122 = sphi 0, %s121
      %s136 = sphi 0, %s122
      %s140 = sphi 0, %s140
      %s142 = sphi 0, %s140
      %s143 = sphi 0, %s142
      %s157 = sphi 0, %s143
      %s161 = sphi 0, %s161
      %s163 = sphi 0, %s161
      %s164 = sphi 0, %s163
      %s178 = sphi 0, %s164
      %s184 = sphi 0, %s186
      %s187 = sphi 0, %s184
      %s188 = sphi 0, %s187
      %s204 = sphi 0, %s188
    $region4: #{tpu_custom_call.1} parent=1 // loop_header_branch
      %25 = sbr.rel (%p23) target = $region8
    $region5: #{tpu_custom_call.1} parent=1 // loop_body
      %s27 = ssub.s32 %s22, 1
      %s28 = ssub.s32 %s22, 2
      %s29 = sadd.s32 %s22, 1
      %s30 = ssub.s32 %s22, %s29
      %p31 = scmp.eq.s32.totalorder %s30, 0
      %s33 = sadd.s32 %s32, 1
      %s34 = scalar_select %p31, %s32, %s33
      %p37 = pneg %p31
      %p38 = scmp.eq.s32.totalorder %s22, 5
      %p39 = por %p37, %p38
      %p40 = scmp.ne.s32.totalorder %s32, %s35
      %p41 = scmp.eq.s32.totalorder %s22, 0
      %p42 = por %p40, %p41
      %p43 = scmp.ne.s32.totalorder %s32, %s35
      %p44 = scmp.eq.s32.totalorder %s27, 5
      %p45 = por %p43, %p44
      %p46 = scmp.ne.s32.totalorder %s35, %s36
      %p47 = scmp.eq.s32.totalorder %s27, 0
      %p48 = por %p46, %p47
      %p49 = scmp.ne.s32.totalorder %s35, %s36
      %p50 = scmp.eq.s32.totalorder %s28, 5
      %p51 = por %p49, %p50
      %p53 = scmp.ne.s32.totalorder %s36, %s52
      %p54 = scmp.eq.s32.totalorder %s28, 0
      %p55 = por %p53, %p54
      %s57 = sadd.s32 %s56, 1
      %p60 = scmp.eq.s32.totalorder %s22, 5
      %p61 = scmp.ne.s32.totalorder %s56, %s58
      %p62 = scmp.eq.s32.totalorder %s22, 0
      %p63 = por %p61, %p62
      %p64 = scmp.ne.s32.totalorder %s56, %s58
      %p65 = scmp.eq.s32.totalorder %s27, 5
      %p66 = por %p64, %p65
      %p67 = scmp.ne.s32.totalorder %s58, %s59
      %p68 = scmp.eq.s32.totalorder %s27, 0
      %p69 = por %p67, %p68
      %p70 = scmp.ne.s32.totalorder %s58, %s59
      %p71 = scmp.eq.s32.totalorder %s28, 5
      %p72 = por %p70, %p71
      %p74 = scmp.ne.s32.totalorder %s59, %s73
      %p75 = scmp.eq.s32.totalorder %s28, 0
      %p76 = por %p74, %p75
      %s78 = sadd.s32 %s77, 1
      %p81 = scmp.eq.s32.totalorder %s22, 5
      %p82 = scmp.ne.s32.totalorder %s77, %s79
      %p83 = scmp.eq.s32.totalorder %s22, 0
      %p84 = por %p82, %p83
      %p85 = scmp.ne.s32.totalorder %s77, %s79
      %p86 = scmp.eq.s32.totalorder %s27, 5
      %p87 = por %p85, %p86
      %p88 = scmp.ne.s32.totalorder %s79, %s80
      %p89 = scmp.eq.s32.totalorder %s27, 0
      %p90 = por %p88, %p89
      %p91 = scmp.ne.s32.totalorder %s79, %s80
      %p92 = scmp.eq.s32.totalorder %s28, 5
      %p93 = por %p91, %p92
      %p95 = scmp.ne.s32.totalorder %s80, %s94
      %p96 = scmp.eq.s32.totalorder %s28, 0
      %p97 = por %p95, %p96
      %s99 = sadd.s32 %s98, 1
      %p102 = scmp.eq.s32.totalorder %s22, 5
      %p103 = scmp.ne.s32.totalorder %s98, %s100
      %p104 = scmp.eq.s32.totalorder %s22, 0
      %p105 = por %p103, %p104
      %p106 = scmp.ne.s32.totalorder %s98, %s100
      %p107 = scmp.eq.s32.totalorder %s27, 5
      %p108 = por %p106, %p107
      %p109 = scmp.ne.s32.totalorder %s100, %s101
      %p110 = scmp.eq.s32.totalorder %s27, 0
      %p111 = por %p109, %p110
      %p112 = scmp.ne.s32.totalorder %s100, %s101
      %p113 = scmp.eq.s32.totalorder %s28, 5
      %p114 = por %p112, %p113
      %p116 = scmp.ne.s32.totalorder %s101, %s115
      %p117 = scmp.eq.s32.totalorder %s28, 0
      %p118 = por %p116, %p117
      %s120 = sadd.s32 %s119, 1
      %p123 = scmp.eq.s32.totalorder %s22, 5
      %p124 = scmp.ne.s32.totalorder %s119, %s121
      %p125 = scmp.eq.s32.totalorder %s22, 0
      %p126 = por %p124, %p125
      %p127 = scmp.ne.s32.totalorder %s119, %s121
      %p128 = scmp.eq.s32.totalorder %s27, 5
      %p129 = por %p127, %p128
      %p130 = scmp.ne.s32.totalorder %s121, %s122
      %p131 = scmp.eq.s32.totalorder %s27, 0
      %p132 = por %p130, %p131
      %p133 = scmp.ne.s32.totalorder %s121, %s122
      %p134 = scmp.eq.s32.totalorder %s28, 5
      %p135 = por %p133, %p134
      %p137 = scmp.ne.s32.totalorder %s122, %s136
      %p138 = scmp.eq.s32.totalorder %s28, 0
      %p139 = por %p137, %p138
      %s141 = sadd.s32 %s140, 1
      %p144 = scmp.eq.s32.totalorder %s22, 5
      %p145 = scmp.ne.s32.totalorder %s140, %s142
      %p146 = scmp.eq.s32.totalorder %s22, 0
      %p147 = por %p145, %p146
      %p148 = scmp.ne.s32.totalorder %s140, %s142
      %p149 = scmp.eq.s32.totalorder %s27, 5
      %p150 = por %p148, %p149
      %p151 = scmp.ne.s32.totalorder %s142, %s143
      %p152 = scmp.eq.s32.totalorder %s27, 0
      %p153 = por %p151, %p152
      %p154 = scmp.ne.s32.totalorder %s142, %s143
      %p155 = scmp.eq.s32.totalorder %s28, 5
      %p156 = por %p154, %p155
      %p158 = scmp.ne.s32.totalorder %s143, %s157
      %p159 = scmp.eq.s32.totalorder %s28, 0
      %p160 = por %p158, %p159
      %s162 = sadd.s32 %s161, 1
      %p165 = scmp.eq.s32.totalorder %s22, 5
      %p166 = scmp.ne.s32.totalorder %s161, %s163
      %p167 = scmp.eq.s32.totalorder %s22, 0
      %p168 = por %p166, %p167
      %p169 = scmp.ne.s32.totalorder %s161, %s163
      %p170 = scmp.eq.s32.totalorder %s27, 5
      %p171 = por %p169, %p170
      %p172 = scmp.ne.s32.totalorder %s163, %s164
      %p173 = scmp.eq.s32.totalorder %s27, 0
      %p174 = por %p172, %p173
      %p175 = scmp.ne.s32.totalorder %s163, %s164
      %p176 = scmp.eq.s32.totalorder %s28, 5
      %p177 = por %p175, %p176
      %p179 = scmp.ne.s32.totalorder %s164, %s178
      %p180 = scmp.eq.s32.totalorder %s28, 0
      %p181 = por %p179, %p180
      %s182 = ssub.s32 %s22, %s29
      %p183 = scmp.eq.s32.totalorder %s182, 0
      %s185 = sadd.s32 %s184, 1
      %s186 = scalar_select %p183, %s184, %s185
      %p189 = pneg %p183
      %p190 = scmp.eq.s32.totalorder %s22, 5
      %p191 = por %p189, %p190
      %p192 = scmp.ne.s32.totalorder %s184, %s187
      %p193 = scmp.eq.s32.totalorder %s22, 0
      %p194 = por %p192, %p193
      %p195 = scmp.ne.s32.totalorder %s184, %s187
      %p196 = scmp.eq.s32.totalorder %s27, 5
      %p197 = por %p195, %p196
      %p198 = scmp.ne.s32.totalorder %s187, %s188
      %p199 = scmp.eq.s32.totalorder %s27, 0
      %p200 = por %p198, %p199
      %p201 = scmp.ne.s32.totalorder %s187, %s188
      %p202 = scmp.eq.s32.totalorder %s28, 5
      %p203 = por %p201, %p202
      %p205 = scmp.ne.s32.totalorder %s188, %s204
      %p206 = scmp.eq.s32.totalorder %s28, 0
      %p207 = por %p205, %p206
      %p208 = scmp.le.s32.totalorder 1, %s22
      %p209 = scmp.lt.s32.totalorder %s22, 7
      %p210 = pnand %p208, %p209
      %p211 = pneg %p210
      // Predicated region
      $region9: #{tpu_custom_call.1} parent=5 // pred_check
        _
      $region10: #{tpu_custom_call.1} parent=5 // pred_check_branch
        %213 = sbr.rel (%p210) target = $region12
      $region11: #{tpu_custom_call.1} parent=5 // pred_region
        %s214 = ssub.s32 %s22, 1
        // Predicated region
        $region13: #{tpu_custom_call.1} parent=11 // pred_check
          %p215 = pneg %p69
        $region14: #{tpu_custom_call.1} parent=11 // pred_check_branch
          %217 = sbr.rel (%p215) target = $region16
        $region15: #{tpu_custom_call.1} parent=11 // pred_region
          %s219 = ssub.s32 256, 256
          %220 = vsyncadd [#allocation8], %s219
          %s221 = sshll.u32 [#allocation7], 4
          %s222 = int_to_ptr.vmem [resolvable:$true] %s221
          %227 = dma.hbm_to_vmem [thread:$0]  %s1, 256, %s222, [#allocation8], 128, 128, 8
        $region16: #{tpu_custom_call.1} parent=11 // pred_fallthru
          _
        // Predicated region
        $region17: #{tpu_custom_call.1} parent=11 // pred_check
          %p228 = pneg %p90
        $region18: #{tpu_custom_call.1} parent=11 // pred_check_branch
          %230 = sbr.rel (%p228) target = $region20
        $region19: #{tpu_custom_call.1} parent=11 // pred_region
          %s232 = ssub.s32 2048, 2048
          %233 = vsyncadd [#allocation8], %s232
          %s234 = sshll.u32 [#allocation9], 4
          %s235 = int_to_ptr.vmem [resolvable:$true] %s234
          %240 = dma.hbm_to_vmem [thread:$0]  %s2, 2048, %s235, [#allocation8], 128, 128, 8
        $region20: #{tpu_custom_call.1} parent=11 // pred_fallthru
          _
        // Predicated region
        $region21: #{tpu_custom_call.1} parent=11 // pred_check
          %p241 = pneg %p111
        $region22: #{tpu_custom_call.1} parent=11 // pred_check_branch
          %243 = sbr.rel (%p241) target = $region24
        $region23: #{tpu_custom_call.1} parent=11 // pred_region
          %s245 = ssub.s32 8192, 8192
          %246 = vsyncadd [#allocation11], %s245
          %s247 = sshll.u32 [#allocation10], 4
          %s248 = int_to_ptr.vmem [resolvable:$true] %s247
          %253 = dma.hbm_to_vmem [thread:$0]  %s3, 8192, %s248, [#allocation11], 512, 512, 32
        $region24: #{tpu_custom_call.1} parent=11 // pred_fallthru
          _
        // Predicated region
        $region25: #{tpu_custom_call.1} parent=11 // pred_check
          %p254 = pneg %p132
        $region26: #{tpu_custom_call.1} parent=11 // pred_check_branch
          %256 = sbr.rel (%p254) target = $region28
        $region27: #{tpu_custom_call.1} parent=11 // pred_region
          %s258 = ssub.s32 1024, 1024
          %259 = vsyncadd [#allocation11], %s258
          %s260 = sshll.u32 [#allocation12], 4
          %s261 = int_to_ptr.vmem [resolvable:$true] %s260
          %266 = dma.hbm_to_vmem [thread:$0]  %s4, 1024, %s261, [#allocation11], 128, 128, 8
        $region28: #{tpu_custom_call.1} parent=11 // pred_fallthru
          _
        // Predicated region
        $region29: #{tpu_custom_call.1} parent=11 // pred_check
          %p267 = pneg %p153
        $region30: #{tpu_custom_call.1} parent=11 // pred_check_branch
          %269 = sbr.rel (%p267) target = $region32
        $region31: #{tpu_custom_call.1} parent=11 // pred_region
          %s271 = ssub.s32 4096, 4096
          %272 = vsyncadd [#allocation14], %s271
          %s273 = sshll.u32 [#allocation13], 4
          %s274 = int_to_ptr.vmem [resolvable:$true] %s273
          %279 = dma.hbm_to_vmem [thread:$0]  %s5, 4096, %s274, [#allocation14], 256, 256, 16
        $region32: #{tpu_custom_call.1} parent=11 // pred_fallthru
          _
        // Predicated region
        $region33: #{tpu_custom_call.1} parent=11 // pred_check
          %p280 = pneg %p174
        $region34: #{tpu_custom_call.1} parent=11 // pred_check_branch
          %282 = sbr.rel (%p280) target = $region36
        $region35: #{tpu_custom_call.1} parent=11 // pred_region
          _
        $region36: #{tpu_custom_call.1} parent=11 // pred_fallthru
          _
      $region12: #{tpu_custom_call.1} parent=5 // pred_fallthru
        _
      %p283 = scmp.lt.s32.totalorder %s22, 6
      // Predicated region
      $region37: #{tpu_custom_call.1} parent=5 // pred_check
        %p284 = pneg %p283
      $region38: #{tpu_custom_call.1} parent=5 // pred_check_branch
        %286 = sbr.rel (%p284) target = $region40
      $region39: #{tpu_custom_call.1} parent=5 // pred_region
        // Predicated region
        $region41: #{tpu_custom_call.1} parent=39 // pred_check
          %p287 = pneg %p42
        $region42: #{tpu_custom_call.1} parent=39 // pred_check_branch
          %289 = sbr.rel (%p287) target = $region44
        $region43: #{tpu_custom_call.1} parent=39 // pred_region
          %s290 = sand.u32 %s32, 1
          %s291 = scalar_lea.sflag [#allocation5], %s290
          %s292 = sand.u32 %s32, 1
          %s293 = smul.addr %s292, 8
          %s294 = scalar_lea.vmem [#allocation4], %s293
          %s296 = ssub.s32 128, 128
          %297 = vsyncadd %s291, %s296
          %s298 = smul.addr %s22, 128
          %s299 = scalar_lea.hbm %s0, %s298
          %s301 = sshll.u32 %s294, 4
          %s302 = int_to_ptr.vmem [resolvable:$true] %s301
          %304 = dma.hbm_to_vmem [thread:$0]  %s299, 128, %s302, %s291
        $region44: #{tpu_custom_call.1} parent=39 // pred_fallthru
          _
      $region40: #{tpu_custom_call.1} parent=5 // pred_fallthru
        _
      %p305 = scmp.le.s32.totalorder 1, %s22
      %p306 = scmp.lt.s32.totalorder %s22, 7
      %p307 = pnand %p305, %p306
      %p308 = pneg %p307
      // Predicated region
      $region45: #{tpu_custom_call.1} parent=5 // pred_check
        _
      $region46: #{tpu_custom_call.1} parent=5 // pred_check_branch
        %310 = sbr.rel (%p307) target = $region48
      $region47: #{tpu_custom_call.1} parent=5 // pred_region
        %s311 = ssub.s32 %s22, 1
        %s312 = sand.u32 %s35, 1
        %s313 = scalar_lea.sflag [#allocation5], %s312
        %s314 = sand.u32 %s35, 1
        %s315 = smul.addr %s314, 8
        %s316 = scalar_lea.vmem [#allocation4], %s315
        // Predicated region
        $region49: #{tpu_custom_call.1} parent=47 // pred_check
          %p317 = pneg %p48
        $region50: #{tpu_custom_call.1} parent=47 // pred_check_branch
          %319 = sbr.rel (%p317) target = $region52
        $region51: #{tpu_custom_call.1} parent=47 // pred_region
          %320 = dma.done %s313, 128
        $region52: #{tpu_custom_call.1} parent=47 // pred_fallthru
          _
        // Predicated region
        $region53: #{tpu_custom_call.1} parent=47 // pred_check
          %p321 = pneg %p69
        $region54: #{tpu_custom_call.1} parent=47 // pred_check_branch
          %323 = sbr.rel (%p321) target = $region56
        $region55: #{tpu_custom_call.1} parent=47 // pred_region
          %324 = dma.done [#allocation8], 256
        $region56: #{tpu_custom_call.1} parent=47 // pred_fallthru
          _
        // Predicated region
        $region57: #{tpu_custom_call.1} parent=47 // pred_check
          %p325 = pneg %p90
        $region58: #{tpu_custom_call.1} parent=47 // pred_check_branch
          %327 = sbr.rel (%p325) target = $region60
        $region59: #{tpu_custom_call.1} parent=47 // pred_region
          %328 = dma.done [#allocation8], 2048
        $region60: #{tpu_custom_call.1} parent=47 // pred_fallthru
          _
        // Predicated region
        $region61: #{tpu_custom_call.1} parent=47 // pred_check
          %p329 = pneg %p111
        $region62: #{tpu_custom_call.1} parent=47 // pred_check_branch
          %331 = sbr.rel (%p329) target = $region64
        $region63: #{tpu_custom_call.1} parent=47 // pred_region
          %332 = dma.done [#allocation11], 8192
        $region64: #{tpu_custom_call.1} parent=47 // pred_fallthru
          _
        // Predicated region
        $region65: #{tpu_custom_call.1} parent=47 // pred_check
          %p333 = pneg %p132
        $region66: #{tpu_custom_call.1} parent=47 // pred_check_branch
          %335 = sbr.rel (%p333) target = $region68
        $region67: #{tpu_custom_call.1} parent=47 // pred_region
          %336 = dma.done [#allocation11], 1024
        $region68: #{tpu_custom_call.1} parent=47 // pred_fallthru
          _
        // Predicated region
        $region69: #{tpu_custom_call.1} parent=47 // pred_check
          %p337 = pneg %p153
        $region70: #{tpu_custom_call.1} parent=47 // pred_check_branch
          %339 = sbr.rel (%p337) target = $region72
        $region71: #{tpu_custom_call.1} parent=47 // pred_region
          %340 = dma.done [#allocation14], 4096
        $region72: #{tpu_custom_call.1} parent=47 // pred_fallthru
          _
        %s341 = sand.u32 %s35, 1
        %s342 = scalar_lea.sflag [#allocation5], %s341
        %s343 = sand.u32 %s35, 1
        %s344 = smul.addr %s343, 8
        %s345 = scalar_lea.vmem [#allocation4], %s344
        %p346 = pneg %p48
        %p347 = pneg %p45
        %p348 = pneg %p69
        %p349 = pneg %p66
        %p350 = pneg %p90
        %p351 = pneg %p87
        %p352 = pneg %p111
        %p353 = pneg %p108
        %p354 = pneg %p132
        %p355 = pneg %p129
        %p356 = pneg %p153
        %p357 = pneg %p150
        %p358 = pneg %p174
        %p359 = pneg %p171
        %p360 = pneg %p200
        %p361 = pneg %p197
        %s362 = sand.u32 %s187, 1
        %s363 = scalar_lea.sflag [#allocation6], %s362
        %s364 = sand.u32 %s187, 1
        %s365 = smul.addr %s364, 24
        %s366 = scalar_lea.vmem [#allocation15], %s365
        %p367 = scmp.eq.s32.totalorder %s27, 0
        // Predicated region
        $region73: #{tpu_custom_call.1} parent=47 // pred_check
          %p368 = pneg %p367
        $region74: #{tpu_custom_call.1} parent=47 // pred_check_branch
          %370 = sbr.rel (%p368) target = $region76
        $region75: #{tpu_custom_call.1} parent=47 // pred_region
          %v371 = vld [vmem:[#allocation7] sm:$0xff]
          %372 = vst [vmem:[#allocation2] sm:$0xff] %v371
          %s373 = scalar_lea.vmem [#allocation7], 8
          %v374 = vld [vmem:[%s373] sm:$0xff]
          %375 = vst [vmem:[#allocation3] sm:$0xff] %v374
        $region76: #{tpu_custom_call.1} parent=47 // pred_fallthru
          _
        %v376 = vld [vmem:[%s316] sm:$0xff]
        %v377 = vld [vmem:[#allocation2] sm:$0xff]
        %v378 = vld [vmem:[#allocation3] sm:$0xff]
        %v379 = vld [vmem:[%s6] ss:$4 sm:$0xf]
        %v380 = vld [vmem:[#allocation10] sm:$0xff]
        %v381 = vld [vmem:[#allocation10 + $0x8] sm:$0xff]
        %v382 = vld [vmem:[#allocation10 + $0x10] sm:$0xff]
        %v383 = vld [vmem:[#allocation10 + $0x18] sm:$0xff]
        %v384 = vld [vmem:[#allocation10 + $0x20] sm:$0xff]
        %v385 = vld [vmem:[#allocation10 + $0x28] sm:$0xff]
        %v386 = vld [vmem:[#allocation10 + $0x30] sm:$0xff]
        %v387 = vld [vmem:[#allocation10 + $0x38] sm:$0xff]
        %v388 = vld [vmem:[#allocation10 + $0x40] sm:$0xff]
        %v389 = vld [vmem:[#allocation10 + $0x48] sm:$0xff]
        %v390 = vld [vmem:[#allocation10 + $0x50] sm:$0xff]
        %v391 = vld [vmem:[#allocation10 + $0x58] sm:$0xff]
        %v392 = vld [vmem:[#allocation10 + $0x60] sm:$0xff]
        %v393 = vld [vmem:[#allocation10 + $0x68] sm:$0xff]
        %v394 = vld [vmem:[#allocation10 + $0x70] sm:$0xff]
        %v395 = vld [vmem:[#allocation10 + $0x78] sm:$0xff]
        %v396 = vld [vmem:[#allocation10 + $0x80] sm:$0xff]
        %v397 = vld [vmem:[#allocation10 + $0x88] sm:$0xff]
        %v398 = vld [vmem:[#allocation10 + $0x90] sm:$0xff]
        %v399 = vld [vmem:[#allocation10 + $0x98] sm:$0xff]
        %v400 = vld [vmem:[#allocation10 + $0xa0] sm:$0xff]
        %v401 = vld [vmem:[#allocation10 + $0xa8] sm:$0xff]
        %v402 = vld [vmem:[#allocation10 + $0xb0] sm:$0xff]
        %v403 = vld [vmem:[#allocation10 + $0xb8] sm:$0xff]
        %v404 = vld [vmem:[#allocation10 + $0xc0] sm:$0xff]
        %v405 = vld [vmem:[#allocation10 + $0xc8] sm:$0xff]
        %v406 = vld [vmem:[#allocation10 + $0xd0] sm:$0xff]
        %v407 = vld [vmem:[#allocation10 + $0xd8] sm:$0xff]
        %v408 = vld [vmem:[#allocation10 + $0xe0] sm:$0xff]
        %v409 = vld [vmem:[#allocation10 + $0xe8] sm:$0xff]
        %v410 = vld [vmem:[#allocation10 + $0xf0] sm:$0xff]
        %v411 = vld [vmem:[#allocation10 + $0xf8] sm:$0xff]
        %v412 = vld [vmem:[#allocation10 + $0x100] sm:$0xff]
        %v413 = vld [vmem:[#allocation10 + $0x108] sm:$0xff]
        %v414 = vld [vmem:[#allocation10 + $0x110] sm:$0xff]
        %v415 = vld [vmem:[#allocation10 + $0x118] sm:$0xff]
        %v416 = vld [vmem:[#allocation10 + $0x120] sm:$0xff]
        %v417 = vld [vmem:[#allocation10 + $0x128] sm:$0xff]
        %v418 = vld [vmem:[#allocation10 + $0x130] sm:$0xff]
        %v419 = vld [vmem:[#allocation10 + $0x138] sm:$0xff]
        %v420 = vld [vmem:[#allocation10 + $0x140] sm:$0xff]
        %v421 = vld [vmem:[#allocation10 + $0x148] sm:$0xff]
        %v422 = vld [vmem:[#allocation10 + $0x150] sm:$0xff]
        %v423 = vld [vmem:[#allocation10 + $0x158] sm:$0xff]
        %v424 = vld [vmem:[#allocation10 + $0x160] sm:$0xff]
        %v425 = vld [vmem:[#allocation10 + $0x168] sm:$0xff]
        %v426 = vld [vmem:[#allocation10 + $0x170] sm:$0xff]
        %v427 = vld [vmem:[#allocation10 + $0x178] sm:$0xff]
        %v428 = vld [vmem:[#allocation10 + $0x180] sm:$0xff]
        %v429 = vld [vmem:[#allocation10 + $0x188] sm:$0xff]
        %v430 = vld [vmem:[#allocation10 + $0x190] sm:$0xff]
        %v431 = vld [vmem:[#allocation10 + $0x198] sm:$0xff]
        %v432 = vld [vmem:[#allocation10 + $0x1a0] sm:$0xff]
        %v433 = vld [vmem:[#allocation10 + $0x1a8] sm:$0xff]
        %v434 = vld [vmem:[#allocation10 + $0x1b0] sm:$0xff]
        %v435 = vld [vmem:[#allocation10 + $0x1b8] sm:$0xff]
        %v436 = vld [vmem:[#allocation10 + $0x1c0] sm:$0xff]
        %v437 = vld [vmem:[#allocation10 + $0x1c8] sm:$0xff]
        %v438 = vld [vmem:[#allocation10 + $0x1d0] sm:$0xff]
        %v439 = vld [vmem:[#allocation10 + $0x1d8] sm:$0xff]
        %v440 = vld [vmem:[#allocation10 + $0x1e0] sm:$0xff]
        %v441 = vld [vmem:[#allocation10 + $0x1e8] sm:$0xff]
        %v442 = vld [vmem:[#allocation10 + $0x1f0] sm:$0xff]
        %v443 = vld [vmem:[#allocation10 + $0x1f8] sm:$0xff]
        %v445 = vlaneseq
        %v446 = vshrl.u32 %v445, 7
        %v447 = vsub.s32 0, %v446
        %v448 = vrot.slane %v379, %v447
        %v449 = vlaneseq
        %v450 = vshrl.u32 %v449, 7
        %v451 = vsub.s32 1, %v450
        %v452 = vrot.slane %v379, %v451
        %v453 = vlaneseq
        %v454 = vshrl.u32 %v453, 7
        %v455 = vsub.s32 2, %v454
        %v456 = vrot.slane %v379, %v455
        %v457 = vlaneseq
        %v458 = vshrl.u32 %v457, 7
        %v459 = vsub.s32 3, %v458
        %v460 = vrot.slane %v379, %v459
        %465 = vmatprep.subr.mxu0 %v381
        %466 = vmatpush1.msra.mxu0 %v380
        %467 = vmatprep.subr.mxu0 %v385
        %468 = vmatpush1.msra.mxu0 %v384
        %469 = vmatprep.subr.mxu0 %v389
        %470 = vmatpush1.msra.mxu0 %v388
        %471 = vmatprep.subr.mxu0 %v393
        %472 = vmatpush1.msra.mxu0 %v392
        %473 = vmatprep.subr.mxu0 %v397
        %474 = vmatpush1.msra.mxu0 %v396
        %475 = vmatprep.subr.mxu0 %v401
        %476 = vmatpush1.msra.mxu0 %v400
        %477 = vmatprep.subr.mxu0 %v405
        %478 = vmatpush1.msra.mxu0 %v404
        %479 = vmatprep.subr.mxu0 %v409
        %480 = vmatpush1.msra.mxu0 %v408
        %481 = vmatprep.subr.mxu0 %v413
        %482 = vmatpush1.msra.mxu0 %v412
        %483 = vmatprep.subr.mxu0 %v417
        %484 = vmatpush1.msra.mxu0 %v416
        %485 = vmatprep.subr.mxu0 %v421
        %486 = vmatpush1.msra.mxu0 %v420
        %487 = vmatprep.subr.mxu0 %v425
        %488 = vmatpush1.msra.mxu0 %v424
        %489 = vmatprep.subr.mxu0 %v429
        %490 = vmatpush1.msra.mxu0 %v428
        %491 = vmatprep.subr.mxu0 %v433
        %492 = vmatpush1.msra.mxu0 %v432
        %493 = vmatprep.subr.mxu0 %v437
        %494 = vmatpush1.msra.mxu0 %v436
        %495 = vmatprep.subr.mxu0 %v441
        %496 = vmatpush1.msra.mxu0 %v440
        %497 = vmatprep.subr.mxu0 0.0
        %498 = vmatpush1.msra.mxu0 0.0
        %499 = vmatprep.subr.mxu0 0.0
        %500 = vmatpush1.msra.mxu0 0.0
        %501 = vmatprep.subr.mxu0 0.0
        %502 = vmatpush1.msra.mxu0 0.0
        %503 = vmatprep.subr.mxu0 0.0
        %504 = vmatpush1.msra.mxu0 0.0
        %505 = vmatprep.subr.mxu0 0.0
        %506 = vmatpush1.msra.mxu0 0.0
        %507 = vmatprep.subr.mxu0 0.0
        %508 = vmatpush1.msra.mxu0 0.0
        %509 = vmatprep.subr.mxu0 0.0
        %510 = vmatpush1.msra.mxu0 0.0
        %511 = vmatprep.subr.mxu0 0.0
        %512 = vmatpush1.msra.mxu0 0.0
        %513 = vmatprep.subr.mxu0 0.0
        %514 = vmatpush1.msra.mxu0 0.0
        %515 = vmatprep.subr.mxu0 0.0
        %516 = vmatpush1.msra.mxu0 0.0
        %517 = vmatprep.subr.mxu0 0.0
        %518 = vmatpush1.msra.mxu0 0.0
        %519 = vmatprep.subr.mxu0 0.0
        %520 = vmatpush1.msra.mxu0 0.0
        %521 = vmatprep.subr.mxu0 0.0
        %522 = vmatpush1.msra.mxu0 0.0
        %523 = vmatprep.subr.mxu0 0.0
        %524 = vmatpush1.msra.mxu0 0.0
        %525 = vmatprep.subr.mxu0 0.0
        %526 = vmatpush1.msra.mxu0 0.0
        %527 = vmatprep.subr.mxu0 0.0
        %528 = vmatpush1.msra.mxu0 0.0
        %529 = vmatprep.mubr.f32.mxu0 0.0
        %530 = vmatmul.mubr.f32.gmra.mrb[0].mxu0 %v377
        %v531 = vpop.f32.mrb[0].mxu0
        %v532 = vadd.f32 %v448, %v531
        %v533 = vpop.f32.mrb[0].mxu0
        %v534 = vadd.f32 %v452, %v533
        %535 = vdwg.mxu0
        %536 = vmatprep.subr.mxu0 %v383
        %537 = vmatpush1.msra.mxu0 %v382
        %538 = vmatprep.subr.mxu0 %v387
        %539 = vmatpush1.msra.mxu0 %v386
        %540 = vmatprep.subr.mxu0 %v391
        %541 = vmatpush1.msra.mxu0 %v390
        %542 = vmatprep.subr.mxu0 %v395
        %543 = vmatpush1.msra.mxu0 %v394
        %544 = vmatprep.subr.mxu0 %v399
        %545 = vmatpush1.msra.mxu0 %v398
        %546 = vmatprep.subr.mxu0 %v403
        %547 = vmatpush1.msra.mxu0 %v402
        %548 = vmatprep.subr.mxu0 %v407
        %549 = vmatpush1.msra.mxu0 %v406
        %550 = vmatprep.subr.mxu0 %v411
        %551 = vmatpush1.msra.mxu0 %v410
        %552 = vmatprep.subr.mxu0 %v415
        %553 = vmatpush1.msra.mxu0 %v414
        %554 = vmatprep.subr.mxu0 %v419
        %555 = vmatpush1.msra.mxu0 %v418
        %556 = vmatprep.subr.mxu0 %v423
        %557 = vmatpush1.msra.mxu0 %v422
        %558 = vmatprep.subr.mxu0 %v427
        %559 = vmatpush1.msra.mxu0 %v426
        %560 = vmatprep.subr.mxu0 %v431
        %561 = vmatpush1.msra.mxu0 %v430
        %562 = vmatprep.subr.mxu0 %v435
        %563 = vmatpush1.msra.mxu0 %v434
        %564 = vmatprep.subr.mxu0 %v439
        %565 = vmatpush1.msra.mxu0 %v438
        %566 = vmatprep.subr.mxu0 %v443
        %567 = vmatpush1.msra.mxu0 %v442
        %568 = vmatprep.subr.mxu0 0.0
        %569 = vmatpush1.msra.mxu0 0.0
        %570 = vmatprep.subr.mxu0 0.0
        %571 = vmatpush1.msra.mxu0 0.0
        %572 = vmatprep.subr.mxu0 0.0
        %573 = vmatpush1.msra.mxu0 0.0
        %574 = vmatprep.subr.mxu0 0.0
        %575 = vmatpush1.msra.mxu0 0.0
        %576 = vmatprep.subr.mxu0 0.0
        %577 = vmatpush1.msra.mxu0 0.0
        %578 = vmatprep.subr.mxu0 0.0
        %579 = vmatpush1.msra.mxu0 0.0
        %580 = vmatprep.subr.mxu0 0.0
        %581 = vmatpush1.msra.mxu0 0.0
        %582 = vmatprep.subr.mxu0 0.0
        %583 = vmatpush1.msra.mxu0 0.0
        %584 = vmatprep.subr.mxu0 0.0
        %585 = vmatpush1.msra.mxu0 0.0
        %586 = vmatprep.subr.mxu0 0.0
        %587 = vmatpush1.msra.mxu0 0.0
        %588 = vmatprep.subr.mxu0 0.0
        %589 = vmatpush1.msra.mxu0 0.0
        %590 = vmatprep.subr.mxu0 0.0
        %591 = vmatpush1.msra.mxu0 0.0
        %592 = vmatprep.subr.mxu0 0.0
        %593 = vmatpush1.msra.mxu0 0.0
        %594 = vmatprep.subr.mxu0 0.0
        %595 = vmatpush1.msra.mxu0 0.0
        %596 = vmatprep.subr.mxu0 0.0
        %597 = vmatpush1.msra.mxu0 0.0
        %598 = vmatprep.subr.mxu0 0.0
        %599 = vmatpush1.msra.mxu0 0.0
        %600 = vmatprep.mubr.f32.mxu0 0.0
        %601 = vmatmul.mubr.f32.gmra.mrb[0].mxu0 %v377
        %v602 = vpop.f32.mrb[0].mxu0
        %v603 = vadd.f32 %v456, %v602
        %v604 = vpop.f32.mrb[0].mxu0
        %v605 = vadd.f32 %v460, %v604
        %606 = vdwg.mxu0
        %v607 = vld [vmem:[#allocation12] sm:$0xff]
        %v608 = vld [vmem:[#allocation12 + $0x8] sm:$0xff]
        %v609 = vld [vmem:[#allocation12 + $0x10] sm:$0xff]
        %v610 = vld [vmem:[#allocation12 + $0x18] sm:$0xff]
        %v611 = vld [vmem:[#allocation12 + $0x20] sm:$0xff]
        %v612 = vld [vmem:[#allocation12 + $0x28] sm:$0xff]
        %v613 = vld [vmem:[#allocation12 + $0x30] sm:$0xff]
        %v614 = vld [vmem:[#allocation12 + $0x38] sm:$0xff]
        %vm615 = vcmask 523264
        %v617 = vsel %vm615, %v376, 0
        %619 = vmatprep.subr.mxu0 0.0
        %620 = vmatpush1.msra.mxu0 %v607
        %621 = vmatprep.subr.mxu0 0.0
        %622 = vmatpush1.msra.mxu0 %v608
        %623 = vmatprep.subr.mxu0 0.0
        %624 = vmatpush1.msra.mxu0 %v609
        %625 = vmatprep.subr.mxu0 0.0
        %626 = vmatpush1.msra.mxu0 %v610
        %627 = vmatprep.subr.mxu0 0.0
        %628 = vmatpush1.msra.mxu0 %v611
        %629 = vmatprep.subr.mxu0 0.0
        %630 = vmatpush1.msra.mxu0 %v612
        %631 = vmatprep.subr.mxu0 0.0
        %632 = vmatpush1.msra.mxu0 %v613
        %633 = vmatprep.subr.mxu0 0.0
        %634 = vmatpush1.msra.mxu0 %v614
        %635 = vmatprep.subr.mxu0 0.0
        %636 = vmatpush1.msra.mxu0 0.0
        %637 = vmatprep.subr.mxu0 0.0
        %638 = vmatpush1.msra.mxu0 0.0
        %639 = vmatprep.subr.mxu0 0.0
        %640 = vmatpush1.msra.mxu0 0.0
        %641 = vmatprep.subr.mxu0 0.0
        %642 = vmatpush1.msra.mxu0 0.0
        %643 = vmatprep.subr.mxu0 0.0
        %644 = vmatpush1.msra.mxu0 0.0
        %645 = vmatprep.subr.mxu0 0.0
        %646 = vmatpush1.msra.mxu0 0.0
        %647 = vmatprep.subr.mxu0 0.0
        %648 = vmatpush1.msra.mxu0 0.0
        %649 = vmatprep.subr.mxu0 0.0
        %650 = vmatpush1.msra.mxu0 0.0
        %651 = vmatprep.subr.mxu0 0.0
        %652 = vmatpush1.msra.mxu0 0.0
        %653 = vmatprep.subr.mxu0 0.0
        %654 = vmatpush1.msra.mxu0 0.0
        %655 = vmatprep.subr.mxu0 0.0
        %656 = vmatpush1.msra.mxu0 0.0
        %657 = vmatprep.subr.mxu0 0.0
        %658 = vmatpush1.msra.mxu0 0.0
        %659 = vmatprep.subr.mxu0 0.0
        %660 = vmatpush1.msra.mxu0 0.0
        %661 = vmatprep.subr.mxu0 0.0
        %662 = vmatpush1.msra.mxu0 0.0
        %663 = vmatprep.subr.mxu0 0.0
        %664 = vmatpush1.msra.mxu0 0.0
        %665 = vmatprep.subr.mxu0 0.0
        %666 = vmatpush1.msra.mxu0 0.0
        %667 = vmatprep.subr.mxu0 0.0
        %668 = vmatpush1.msra.mxu0 0.0
        %669 = vmatprep.subr.mxu0 0.0
        %670 = vmatpush1.msra.mxu0 0.0
        %671 = vmatprep.subr.mxu0 0.0
        %672 = vmatpush1.msra.mxu0 0.0
        %673 = vmatprep.subr.mxu0 0.0
        %674 = vmatpush1.msra.mxu0 0.0
        %675 = vmatprep.subr.mxu0 0.0
        %676 = vmatpush1.msra.mxu0 0.0
        %677 = vmatprep.subr.mxu0 0.0
        %678 = vmatpush1.msra.mxu0 0.0
        %679 = vmatprep.subr.mxu0 0.0
        %680 = vmatpush1.msra.mxu0 0.0
        %681 = vmatprep.subr.mxu0 0.0
        %682 = vmatpush1.msra.mxu0 0.0
        %683 = vmatprep.mubr.f32.mxu0 0.0
        %684 = vmatmul.mubr.f32.gmra.mrb[0].mxu0 %v617
        %v685 = vpop.f32.mrb[0].mxu0
        %v686 = vadd.f32 0.0, %v685
        %v687 = vpop.f32.mrb[0].mxu0
        %688 = vdwg.mxu0
        %v689 = vadd.f32 %v534, %v686
        %v690 = vxor.u32 %v689, 2147483648
        %v691 = vmul.f32 %v690, 1.442695
        %v692 = vpow.pop %v691
        %v693 = vadd.f32 %v692, 1.0
        %v694 = vrcp.pop %v693
        %v695 = vmul.f32 1.0, %v694
        %v696 = vld [vmem:[#allocation9] sm:$0xff]
        %v697 = vld [vmem:[#allocation9 + $0x8] sm:$0xff]
        %v698 = vld [vmem:[#allocation9 + $0x10] sm:$0xff]
        %v699 = vld [vmem:[#allocation9 + $0x18] sm:$0xff]
        %v700 = vld [vmem:[#allocation9 + $0x20] sm:$0xff]
        %v701 = vld [vmem:[#allocation9 + $0x28] sm:$0xff]
        %v702 = vld [vmem:[#allocation9 + $0x30] sm:$0xff]
        %v703 = vld [vmem:[#allocation9 + $0x38] sm:$0xff]
        %v704 = vld [vmem:[#allocation9 + $0x40] sm:$0xff]
        %v705 = vld [vmem:[#allocation9 + $0x48] sm:$0xff]
        %v706 = vld [vmem:[#allocation9 + $0x50] sm:$0xff]
        %v707 = vld [vmem:[#allocation9 + $0x58] sm:$0xff]
        %v708 = vld [vmem:[#allocation9 + $0x60] sm:$0xff]
        %v709 = vld [vmem:[#allocation9 + $0x68] sm:$0xff]
        %v710 = vld [vmem:[#allocation9 + $0x70] sm:$0xff]
        %v711 = vld [vmem:[#allocation9 + $0x78] sm:$0xff]
        %712 = vmatprep.subr.mxu0 0.0
        %713 = vmatpush1.msra.mxu0 %v696
        %714 = vmatprep.subr.mxu0 0.0
        %715 = vmatpush1.msra.mxu0 %v697
        %716 = vmatprep.subr.mxu0 0.0
        %717 = vmatpush1.msra.mxu0 %v698
        %718 = vmatprep.subr.mxu0 0.0
        %719 = vmatpush1.msra.mxu0 %v699
        %720 = vmatprep.subr.mxu0 0.0
        %721 = vmatpush1.msra.mxu0 %v700
        %722 = vmatprep.subr.mxu0 0.0
        %723 = vmatpush1.msra.mxu0 %v701
        %724 = vmatprep.subr.mxu0 0.0
        %725 = vmatpush1.msra.mxu0 %v702
        %726 = vmatprep.subr.mxu0 0.0
        %727 = vmatpush1.msra.mxu0 %v703
        %728 = vmatprep.subr.mxu0 0.0
        %729 = vmatpush1.msra.mxu0 %v704
        %730 = vmatprep.subr.mxu0 0.0
        %731 = vmatpush1.msra.mxu0 %v705
        %732 = vmatprep.subr.mxu0 0.0
        %733 = vmatpush1.msra.mxu0 %v706
        %734 = vmatprep.subr.mxu0 0.0
        %735 = vmatpush1.msra.mxu0 %v707
        %736 = vmatprep.subr.mxu0 0.0
        %737 = vmatpush1.msra.mxu0 %v708
        %738 = vmatprep.subr.mxu0 0.0
        %739 = vmatpush1.msra.mxu0 %v709
        %740 = vmatprep.subr.mxu0 0.0
        %741 = vmatpush1.msra.mxu0 %v710
        %742 = vmatprep.subr.mxu0 0.0
        %743 = vmatpush1.msra.mxu0 %v711
        %744 = vmatprep.subr.mxu0 0.0
        %745 = vmatpush1.msra.mxu0 0.0
        %746 = vmatprep.subr.mxu0 0.0
        %747 = vmatpush1.msra.mxu0 0.0
        %748 = vmatprep.subr.mxu0 0.0
        %749 = vmatpush1.msra.mxu0 0.0
        %750 = vmatprep.subr.mxu0 0.0
        %751 = vmatpush1.msra.mxu0 0.0
        %752 = vmatprep.subr.mxu0 0.0
        %753 = vmatpush1.msra.mxu0 0.0
        %754 = vmatprep.subr.mxu0 0.0
        %755 = vmatpush1.msra.mxu0 0.0
        %756 = vmatprep.subr.mxu0 0.0
        %757 = vmatpush1.msra.mxu0 0.0
        %758 = vmatprep.subr.mxu0 0.0
        %759 = vmatpush1.msra.mxu0 0.0
        %760 = vmatprep.subr.mxu0 0.0
        %761 = vmatpush1.msra.mxu0 0.0
        %762 = vmatprep.subr.mxu0 0.0
        %763 = vmatpush1.msra.mxu0 0.0
        %764 = vmatprep.subr.mxu0 0.0
        %765 = vmatpush1.msra.mxu0 0.0
        %766 = vmatprep.subr.mxu0 0.0
        %767 = vmatpush1.msra.mxu0 0.0
        %768 = vmatprep.subr.mxu0 0.0
        %769 = vmatpush1.msra.mxu0 0.0
        %770 = vmatprep.subr.mxu0 0.0
        %771 = vmatpush1.msra.mxu0 0.0
        %772 = vmatprep.subr.mxu0 0.0
        %773 = vmatpush1.msra.mxu0 0.0
        %774 = vmatprep.subr.mxu0 0.0
        %775 = vmatpush1.msra.mxu0 0.0
        %776 = vmatprep.mubr.f32.mxu0 0.0
        %777 = vmatmul.mubr.f32.gmra.mrb[0].mxu0 %v695
        %v778 = vpop.f32.mrb[0].mxu0
        %v779 = vadd.f32 0.0, %v778
        %v780 = vpop.f32.mrb[0].mxu0
        %781 = vdwg.mxu0
        %v782 = vadd.f32 %v377, %v779
        %s783 = scalar_lea.vmem %s6, 1
        %v784 = vld [vmem:[%s783] ss:$4 sm:$0x3]
        %v785 = vld [vmem:[#allocation13] sm:$0xff]
        %v786 = vld [vmem:[#allocation13 + $0x8] sm:$0xff]
        %v787 = vld [vmem:[#allocation13 + $0x10] sm:$0xff]
        %v788 = vld [vmem:[#allocation13 + $0x18] sm:$0xff]
        %v789 = vld [vmem:[#allocation13 + $0x20] sm:$0xff]
        %v790 = vld [vmem:[#allocation13 + $0x28] sm:$0xff]
        %v791 = vld [vmem:[#allocation13 + $0x30] sm:$0xff]
        %v792 = vld [vmem:[#allocation13 + $0x38] sm:$0xff]
        %v793 = vld [vmem:[#allocation13 + $0x40] sm:$0xff]
        %v794 = vld [vmem:[#allocation13 + $0x48] sm:$0xff]
        %v795 = vld [vmem:[#allocation13 + $0x50] sm:$0xff]
        %v796 = vld [vmem:[#allocation13 + $0x58] sm:$0xff]
        %v797 = vld [vmem:[#allocation13 + $0x60] sm:$0xff]
        %v798 = vld [vmem:[#allocation13 + $0x68] sm:$0xff]
        %v799 = vld [vmem:[#allocation13 + $0x70] sm:$0xff]
        %v800 = vld [vmem:[#allocation13 + $0x78] sm:$0xff]
        %v801 = vld [vmem:[#allocation13 + $0x80] sm:$0xff]
        %v802 = vld [vmem:[#allocation13 + $0x88] sm:$0xff]
        %v803 = vld [vmem:[#allocation13 + $0x90] sm:$0xff]
        %v804 = vld [vmem:[#allocation13 + $0x98] sm:$0xff]
        %v805 = vld [vmem:[#allocation13 + $0xa0] sm:$0xff]
        %v806 = vld [vmem:[#allocation13 + $0xa8] sm:$0xff]
        %v807 = vld [vmem:[#allocation13 + $0xb0] sm:$0xff]
        %v808 = vld [vmem:[#allocation13 + $0xb8] sm:$0xff]
        %v809 = vld [vmem:[#allocation13 + $0xc0] sm:$0xff]
        %v810 = vld [vmem:[#allocation13 + $0xc8] sm:$0xff]
        %v811 = vld [vmem:[#allocation13 + $0xd0] sm:$0xff]
        %v812 = vld [vmem:[#allocation13 + $0xd8] sm:$0xff]
        %v813 = vld [vmem:[#allocation13 + $0xe0] sm:$0xff]
        %v814 = vld [vmem:[#allocation13 + $0xe8] sm:$0xff]
        %v815 = vld [vmem:[#allocation13 + $0xf0] sm:$0xff]
        %v816 = vld [vmem:[#allocation13 + $0xf8] sm:$0xff]
        %v818 = vlaneseq
        %v819 = vshrl.u32 %v818, 7
        %v820 = vsub.s32 0, %v819
        %v821 = vrot.slane %v784, %v820
        %v822 = vlaneseq
        %v823 = vshrl.u32 %v822, 7
        %v824 = vsub.s32 1, %v823
        %v825 = vrot.slane %v784, %v824
        %828 = vmatprep.subr.mxu0 %v786
        %829 = vmatpush1.msra.mxu0 %v785
        %830 = vmatprep.subr.mxu0 %v788
        %831 = vmatpush1.msra.mxu0 %v787
        %832 = vmatprep.subr.mxu0 %v790
        %833 = vmatpush1.msra.mxu0 %v789
        %834 = vmatprep.subr.mxu0 %v792
        %835 = vmatpush1.msra.mxu0 %v791
        %836 = vmatprep.subr.mxu0 %v794
        %837 = vmatpush1.msra.mxu0 %v793
        %838 = vmatprep.subr.mxu0 %v796
        %839 = vmatpush1.msra.mxu0 %v795
        %840 = vmatprep.subr.mxu0 %v798
        %841 = vmatpush1.msra.mxu0 %v797
        %842 = vmatprep.subr.mxu0 %v800
        %843 = vmatpush1.msra.mxu0 %v799
        %844 = vmatprep.subr.mxu0 %v802
        %845 = vmatpush1.msra.mxu0 %v801
        %846 = vmatprep.subr.mxu0 %v804
        %847 = vmatpush1.msra.mxu0 %v803
        %848 = vmatprep.subr.mxu0 %v806
        %849 = vmatpush1.msra.mxu0 %v805
        %850 = vmatprep.subr.mxu0 %v808
        %851 = vmatpush1.msra.mxu0 %v807
        %852 = vmatprep.subr.mxu0 %v810
        %853 = vmatpush1.msra.mxu0 %v809
        %854 = vmatprep.subr.mxu0 %v812
        %855 = vmatpush1.msra.mxu0 %v811
        %856 = vmatprep.subr.mxu0 %v814
        %857 = vmatpush1.msra.mxu0 %v813
        %858 = vmatprep.subr.mxu0 %v816
        %859 = vmatpush1.msra.mxu0 %v815
        %860 = vmatprep.subr.mxu0 0.0
        %861 = vmatpush1.msra.mxu0 0.0
        %862 = vmatprep.subr.mxu0 0.0
        %863 = vmatpush1.msra.mxu0 0.0
        %864 = vmatprep.subr.mxu0 0.0
        %865 = vmatpush1.msra.mxu0 0.0
        %866 = vmatprep.subr.mxu0 0.0
        %867 = vmatpush1.msra.mxu0 0.0
        %868 = vmatprep.subr.mxu0 0.0
        %869 = vmatpush1.msra.mxu0 0.0
        %870 = vmatprep.subr.mxu0 0.0
        %871 = vmatpush1.msra.mxu0 0.0
        %872 = vmatprep.subr.mxu0 0.0
        %873 = vmatpush1.msra.mxu0 0.0
        %874 = vmatprep.subr.mxu0 0.0
        %875 = vmatpush1.msra.mxu0 0.0
        %876 = vmatprep.subr.mxu0 0.0
        %877 = vmatpush1.msra.mxu0 0.0
        %878 = vmatprep.subr.mxu0 0.0
        %879 = vmatpush1.msra.mxu0 0.0
        %880 = vmatprep.subr.mxu0 0.0
        %881 = vmatpush1.msra.mxu0 0.0
        %882 = vmatprep.subr.mxu0 0.0
        %883 = vmatpush1.msra.mxu0 0.0
        %884 = vmatprep.subr.mxu0 0.0
        %885 = vmatpush1.msra.mxu0 0.0
        %886 = vmatprep.subr.mxu0 0.0
        %887 = vmatpush1.msra.mxu0 0.0
        %888 = vmatprep.subr.mxu0 0.0
        %889 = vmatpush1.msra.mxu0 0.0
        %890 = vmatprep.subr.mxu0 0.0
        %891 = vmatpush1.msra.mxu0 0.0
        %892 = vmatprep.mubr.f32.mxu0 0.0
        %893 = vmatmul.mubr.f32.gmra.mrb[0].mxu0 %v782
        %v894 = vpop.f32.mrb[0].mxu0
        %v895 = vadd.f32 %v821, %v894
        %v896 = vpop.f32.mrb[0].mxu0
        %v897 = vadd.f32 %v825, %v896
        %898 = vdwg.mxu0
        %v899 = vld [vmem:[%s6 + $0x3] sm:$0x1]
        %v900 = vlaneseq
        %v901 = vshrl.u32 %v900, 7
        %v902 = vsub.s32 0, %v901
        %v903 = vrot.slane %v899, %v902
        %v904 = vmul.f32 %v378, %v903
        %905 = vadd.xlane.f32.xlu0 %v904
        %v906 = vpop.xlane.xlu0 %905
        %v907 = vadd.f32 %v603, %v906
        %v908 = vxor.u32 %v907, 2147483648
        %v909 = vmul.f32 %v908, 1.442695
        %v910 = vpow.pop %v909
        %v911 = vadd.f32 %v910, 1.0
        %v912 = vrcp.pop %v911
        %v913 = vmul.f32 1.0, %v912
        %v914 = vadd.f32 %v895, %v532
        %v915 = vtanh.pop %v914
        %v916 = vsub.f32 1.0, %v913
        %v917 = vmul.f32 %v916, %v378
        %v918 = vmul.f32 %v913, %v915
        %v919 = vadd.f32 %v917, %v918
        %v920 = vld [vmem:[%s6 + $0x2] sm:$0x1]
        %v921 = vlaneseq
        %v922 = vshrl.u32 %v921, 7
        %v923 = vsub.s32 0, %v922
        %v924 = vrot.slane %v920, %v923
        %v925 = vmul.f32 %v919, %v924
        %926 = vadd.xlane.f32.xlu0 %v925
        %v927 = vpop.xlane.xlu0 %926
        %v928 = vadd.f32 %v897, %v605
        %v929 = vadd.f32 %v928, %v927
        %v930 = vxor.u32 %v929, 2147483648
        %v931 = vmul.f32 %v930, 1.442695
        %v932 = vpow.pop %v931
        %v933 = vadd.f32 %v932, 1.0
        %v934 = vrcp.pop %v933
        %v935 = vmul.f32 1.0, %v934
        %v936 = vtanh.pop %v919
        %v937 = vmul.f32 %v935, %v936
        %938 = vst [vmem:[#allocation2] sm:$0xff] %v937
        %939 = vst [vmem:[#allocation3] sm:$0xff] %v919
        %940 = vst [vmem:[%s366] sm:$0xff] %v937
        %941 = vst [vmem:[%s366 + $0x8] sm:$0xff] %v919
        %942 = vst [vmem:[%s366 + $0x10] sm:$0xff] %v779
        %s943 = sand.u32 %s187, 1
        %s944 = scalar_lea.sflag [#allocation6], %s943
        %s945 = sand.u32 %s187, 1
        %s946 = smul.addr %s945, 24
        %s947 = scalar_lea.vmem [#allocation15], %s946
        // Predicated region
        $region77: #{tpu_custom_call.1} parent=47 // pred_check
          %p948 = pneg %p197
        $region78: #{tpu_custom_call.1} parent=47 // pred_check_branch
          %950 = sbr.rel (%p948) target = $region80
        $region79: #{tpu_custom_call.1} parent=47 // pred_region
          %s952 = ssub.s32 384, 384
          %953 = vsyncadd %s944, %s952
          %s954 = smul.addr %s27, 3
          %s955 = smul.addr %s954, 128
          %s956 = scalar_lea.hbm %s7, %s955
          %s958 = sshll.u32 %s947, 4
          %s959 = int_to_ptr.vmem [resolvable:$true] %s958
          %961 = dma.vmem_to_hbm [thread:$0]  %s959, 384, %s956, %s944
        $region80: #{tpu_custom_call.1} parent=47 // pred_fallthru
          _
      $region48: #{tpu_custom_call.1} parent=5 // pred_fallthru
        _
      %p962 = scmp.le.s32.totalorder 2, %s22
      // Predicated region
      $region81: #{tpu_custom_call.1} parent=5 // pred_check
        %p963 = pneg %p962
      $region82: #{tpu_custom_call.1} parent=5 // pred_check_branch
        %965 = sbr.rel (%p963) target = $region84
      $region83: #{tpu_custom_call.1} parent=5 // pred_region
        %s966 = ssub.s32 %s22, 2
        // Predicated region
        $region85: #{tpu_custom_call.1} parent=83 // pred_check
          %p967 = pneg %p203
        $region86: #{tpu_custom_call.1} parent=83 // pred_check_branch
          %969 = sbr.rel (%p967) target = $region88
        $region87: #{tpu_custom_call.1} parent=83 // pred_region
          %s970 = sand.u32 %s188, 1
          %s971 = scalar_lea.sflag [#allocation6], %s970
          %s972 = sand.u32 %s188, 1
          %s973 = smul.addr %s972, 24
          %s974 = scalar_lea.vmem [#allocation15], %s973
          %975 = dma.done %s971, 384
        $region88: #{tpu_custom_call.1} parent=83 // pred_fallthru
          _
      $region84: #{tpu_custom_call.1} parent=5 // pred_fallthru
        _
    $region6: #{tpu_custom_call.1} parent=1 // loop_footer
      %s26 = sadd.s32 1, %s22
    $region7: #{tpu_custom_call.1} parent=1 // loop_footer_branch
      %21 = sbr.rel target = $region3
    $region8: #{tpu_custom_call.1} parent=1 // loop_exit
      _
    %976 = vsyncpa [#allocation5], 1
    %s977 = scalar_lea.sflag [#allocation5], 1
    %978 = vsyncpa %s977, 1
    %979 = vsyncpa [#allocation8], 1
    %980 = vsyncpa [#allocation11], 1
    %981 = vsyncpa [#allocation14], 1
    %982 = vsyncpa [#allocation6], 1
    %s983 = scalar_lea.sflag [#allocation6], 1
    %984 = vsyncpa %s983, 1

</llo_original>
